<compile_context>
chip_gen: v5e
topology: v5e:2x2
jax: 0.10.0
libtpu: 0.0.40
codegen_flags: <defaults>
</compile_context>

<pallas_src>
import jax
import jax.numpy as jnp
from jax.experimental import pallas as pl
from jax.experimental.pallas import tpu as pltpu


def _bn_fixed_kernel(x_ref, scale_ref, shift_ref, o_ref):
    # x_ref: (Rb, Lb); scale_ref/shift_ref: (Rb, 1) f32, broadcast over lanes.
    x = x_ref[...].astype(jnp.float32)
    o_ref[...] = (x * scale_ref[...] + shift_ref[...]).astype(o_ref.dtype)


def _pick_block(total, base, cap):
    """Largest divisor of `total` that is a multiple of `base` and <= cap.

    Falls back to the full extent when `total` is not a multiple of `base`
    (a full-extent block always satisfies the TPU (8, 128) tiling rule).
    """
    if total % base != 0 or total <= base:
        return total
    best = base
    d = base
    limit = min(total, cap)
    while d <= limit:
        if total % d == 0:
            best = d
        d += base
    return best


def batchnorm_fixed(x, running_mean, running_var, weight, bias, eps=1e-5):
    """x: (N, C, H, W). Per-channel affine batch-norm with fixed running stats."""
    N, C, H, W = x.shape
    R, L = N * C, H * W

    # Fold normalization into one scale/shift per channel (cheap (C,) work
    # done once in the wrapper, outside the per-element path).
    inv_std = jax.lax.rsqrt(running_var.astype(jnp.float32) + jnp.float32(eps))
    scale = weight.astype(jnp.float32) * inv_std                         # (C,)
    shift = bias.astype(jnp.float32) - running_mean.astype(jnp.float32) * scale
    # Row r of the flattened (N*C, H*W) view corresponds to channel r % C.
    scale_rows = jnp.tile(scale, N).reshape(R, 1)
    shift_rows = jnp.tile(shift, N).reshape(R, 1)

    # Free for contiguous NCHW: lane dim becomes H*W (lane-dense).
    x2 = x.reshape(R, L)

    # Lane block: large multiple of 128 (<= 2048) when possible, else full L.
    lb = _pick_block(L, 128, 2048)
    # Row block: fill roughly 4 MiB of input per grid step (double-buffered
    # in + out ~ 4x block bytes -> comfortably inside v7x's 64 MiB VMEM).
    bytes_per_row = lb * x.dtype.itemsize
    row_cap = max(8, (4 * 1024 * 1024) // max(bytes_per_row, 1))
    rb = _pick_block(R, 8, row_cap)

    grid = (pl.cdiv(R, rb), pl.cdiv(L, lb))

    out2 = pl.pallas_call(
        _bn_fixed_kernel,
        out_shape=jax.ShapeDtypeStruct((R, L), x.dtype),
        grid=grid,
        in_specs=[
            pl.BlockSpec((rb, lb), lambda i, j: (i, j)),
            pl.BlockSpec((rb, 1), lambda i, j: (i, 0)),
            pl.BlockSpec((rb, 1), lambda i, j: (i, 0)),
        ],
        out_specs=pl.BlockSpec((rb, lb), lambda i, j: (i, j)),
        compiler_params=pltpu.CompilerParams(
            dimension_semantics=("parallel", "parallel"),
        ),
    )(x2, scale_rows, shift_rows)

    return out2.reshape(N, C, H, W)


def _reference(x, running_mean, running_var, weight, bias, eps=1e-5):
    m = running_mean[None, :, None, None]
    v = running_var[None, :, None, None]
    w = weight[None, :, None, None]
    b = bias[None, :, None, None]
    return (x - m) / jnp.sqrt(v + eps) * w + b


if __name__ == "__main__":
    # Deterministic synthetic parameters (shapes follow BatchNormFixed.__init__,
    # num_features = C). weight ~ U(0,1) like .uniform_(); bias = 0 like .zero_();
    # running stats made non-trivial so the kernel is actually exercised.
    N, C, H, W = 2, 4, 16, 16
    key = jax.random.PRNGKey(0)
    kx, kw, km, kv = jax.random.split(key, 4)

    x = jax.random.normal(kx, (N, C, H, W), dtype=jnp.float32)
    weight = jax.random.uniform(kw, (C,), dtype=jnp.float32)
    bias = jnp.zeros((C,), dtype=jnp.float32)
    running_mean = 0.1 * jax.random.normal(km, (C,), dtype=jnp.float32)
    running_var = jax.random.uniform(kv, (C,), dtype=jnp.float32, minval=0.5, maxval=1.5)

    out = batchnorm_fixed(x, running_mean, running_var, weight, bias)
    out = jax.block_until_ready(out)

    ref = _reference(x, running_mean, running_var, weight, bias)
    assert out.shape == (N, C, H, W)
    assert jnp.allclose(out, ref, atol=1e-5, rtol=1e-5)

    # TODO(synk): training-mode batch-statistics branch (use_global_status=False)
    # updates module buffers statefully and is not implemented here; affine=False
    # is an identity pass-through and needs no kernel.
    print("KERNEL_OK")
</pallas_src>

<mosaic_0001>
module attributes {stable_mosaic.version = 11 : i64} {
  func.func @_bn_fixed_kernel(%arg0: i32, %arg1: i32, %arg2: memref<8x256xf32, #tpu.memory_space<vmem>>, %arg3: memref<8x1xf32, #tpu.memory_space<vmem>>, %arg4: memref<8x1xf32, #tpu.memory_space<vmem>>, %arg5: memref<8x256xf32, #tpu.memory_space<vmem>>) attributes {dimension_semantics = [#tpu.dimension_semantics<parallel>, #tpu.dimension_semantics<parallel>], iteration_bounds = array<i64: 1, 1>, scalar_prefetch = 0 : i64, scratch_operands = 0 : i64, tpu.core_type = #tpu.core_type<tc>, window_params = [{transform_indices = @transform_0, window_bounds = array<i64: 8, 256>}, {transform_indices = @transform_1, window_bounds = array<i64: 8, 1>}, {transform_indices = @transform_2, window_bounds = array<i64: 8, 1>}, {transform_indices = @transform_3, window_bounds = array<i64: 8, 256>}]} {
    %c0 = arith.constant 0 : index
    %c0_0 = arith.constant 0 : index
    %0 = vector.load %arg2[%c0, %c0_0] : memref<8x256xf32, #tpu.memory_space<vmem>>, vector<8x256xf32>
    %c0_1 = arith.constant 0 : index
    %c0_2 = arith.constant 0 : index
    %1 = vector.load %arg3[%c0_1, %c0_2] : memref<8x1xf32, #tpu.memory_space<vmem>>, vector<8x1xf32>
    %2 = vector.broadcast %1 : vector<8x1xf32> to vector<8x256xf32>
    %3 = arith.mulf %0, %2 : vector<8x256xf32>
    %c0_3 = arith.constant 0 : index
    %c0_4 = arith.constant 0 : index
    %4 = vector.load %arg4[%c0_3, %c0_4] : memref<8x1xf32, #tpu.memory_space<vmem>>, vector<8x1xf32>
    %5 = vector.broadcast %4 : vector<8x1xf32> to vector<8x256xf32>
    %6 = arith.addf %3, %5 : vector<8x256xf32>
    %c0_5 = arith.constant 0 : index
    %c0_6 = arith.constant 0 : index
    %7 = vector.load %arg5[%c0_5, %c0_6] : memref<8x256xf32, #tpu.memory_space<vmem>>, vector<8x256xf32>
    tpu.vector_store %arg5[%c0_5, %c0_6], %6 {strides = array<i32>} : memref<8x256xf32, #tpu.memory_space<vmem>>, vector<8x256xf32>,
    return
  }
  func.func @transform_0(%arg0: i32, %arg1: i32) -> (i32, i32) {
    %c0_i32 = arith.constant 0 : i32
    return %arg0, %arg1 : i32, i32
  }
  func.func @transform_1(%arg0: i32, %arg1: i32) -> (i32, i32) {
    %c0_i32 = arith.constant 0 : i32
    %c0_i32_0 = arith.constant 0 : i32
    return %arg0, %c0_i32 : i32, i32
  }
  func.func @transform_2(%arg0: i32, %arg1: i32) -> (i32, i32) {
    %c0_i32 = arith.constant 0 : i32
    %c0_i32_0 = arith.constant 0 : i32
    return %arg0, %c0_i32 : i32, i32
  }
  func.func @transform_3(%arg0: i32, %arg1: i32) -> (i32, i32) {
    %c0_i32 = arith.constant 0 : i32
    return %arg0, %arg1 : i32, i32
  }
}

</mosaic_0001>

<llo_original>
// kernel: tpu_custom_call.1
$region0: #{tpu_custom_call.1}
  #allocation0 [shape = 'u32[]', space=smem, size = 0x4, offset = 0x4, fixed_abs, tag = 'smem constant byte address 0x4 - core index']
  #allocation1 [shape = 'u32[72,128]{1,0:T(1,128)}', space=vmem, size = 0x9000, scoped, tag = 'internal scratch']
  %s0 = inlined_call_operand.vmem [shape: f32[8,256], index: 0, kind: input, shape index: {}]
  %s1 = inlined_call_operand.vmem [shape: f32[8,1], index: 1, kind: input, shape index: {}]
  %s2 = inlined_call_operand.vmem [shape: f32[8,1], index: 2, kind: input, shape index: {}]
  %s3 = inlined_call_operand.hbm [shape: f32[8,256], index: 3, kind: output, shape index: {}]
  %s4 = sld [smem:[#allocation0]]
  $region22: #{tpu_custom_call.1} parent=0
    _
  %s6 = ssub.s32 1, %s4
  %s7 = scalar_select 0, %s6, %s4
  $region1: #{tpu_custom_call.1} parent=0
    #allocation2 [shape = 'u8[8192]{0}', space=vmem, size = 0x2000, scoped, tag = 'output window, operand 0, single buffered']
    #allocation3 [shape = 's32[1]{0}', space=sflag, size = 0x4, scoped, tag = 'scoped memory for tpu_custom_call.1']
    %8 = vsyncpa [#allocation3], 0
    // Predicated region
    $region2: #{tpu_custom_call.1} parent=1 // pred_check
      _
    $region3: #{tpu_custom_call.1} parent=1 // pred_check_branch
      %10 = sbr.rel (0) target = $region5
    $region4: #{tpu_custom_call.1} parent=1 // pred_region
      _
    $region5: #{tpu_custom_call.1} parent=1 // pred_fallthru
      _
    // Predicated region
    $region6: #{tpu_custom_call.1} parent=1 // pred_check
      _
    $region7: #{tpu_custom_call.1} parent=1 // pred_check_branch
      %12 = sbr.rel (0) target = $region9
    $region8: #{tpu_custom_call.1} parent=1 // pred_region
      _
    $region9: #{tpu_custom_call.1} parent=1 // pred_fallthru
      _
    // Predicated region
    $region10: #{tpu_custom_call.1} parent=1 // pred_check
      _
    $region11: #{tpu_custom_call.1} parent=1 // pred_check_branch
      %14 = sbr.rel (0) target = $region13
    $region12: #{tpu_custom_call.1} parent=1 // pred_region
      _
    $region13: #{tpu_custom_call.1} parent=1 // pred_fallthru
      _
    %v15 = vld [vmem:[%s0] sm:$0xff]
    %v16 = vld [vmem:[%s0 + $0x8] sm:$0xff]
    %v17 = vld [vmem:[%s1] sm:$0xff]
    %19 = vset.pattern.permute.xlu0 0
    %20 = vperm.xlu0 %19, %v17
    %v21 = vpop.permute.xlu0 %20
    %v23 = vmul.f32 %v15, %v21
    %v24 = vmul.f32 %v16, %v21
    %v25 = vld [vmem:[%s2] sm:$0xff]
    %27 = vset.pattern.permute.xlu0 0
    %28 = vperm.xlu0 %27, %v25
    %v29 = vpop.permute.xlu0 %28
    %v31 = vadd.f32 %v23, %v29
    %v32 = vadd.f32 %v24, %v29
    %33 = vst [vmem:[#allocation2] sm:$0xff] %v31
    %34 = vst [vmem:[#allocation2 + $0x8] sm:$0xff] %v32
    // Predicated region
    $region14: #{tpu_custom_call.1} parent=1 // pred_check
      _
    $region15: #{tpu_custom_call.1} parent=1 // pred_check_branch
      %36 = sbr.rel (0) target = $region17
    $region16: #{tpu_custom_call.1} parent=1 // pred_region
      %38 = vsyncadd [#allocation3], 0
      %s40 = sshll.u32 [#allocation2], 4
      %s41 = int_to_ptr.vmem [resolvable:$true] %s40
      %s42 = sshll.u32 %s3, 4
      %s43 = int_to_ptr.hbm [resolvable:$true] %s42
      %45 = dma.vmem_to_hbm [thread:$0]  %s41, 256, %s43, [#allocation3]
    $region17: #{tpu_custom_call.1} parent=1 // pred_fallthru
      _
    // Predicated region
    $region18: #{tpu_custom_call.1} parent=1 // pred_check
      _
    $region19: #{tpu_custom_call.1} parent=1 // pred_check_branch
      %47 = sbr.rel (0) target = $region21
    $region20: #{tpu_custom_call.1} parent=1 // pred_region
      %49 = dma.done [#allocation3], 256
    $region21: #{tpu_custom_call.1} parent=1 // pred_fallthru
      _
    %50 = vsyncpa [#allocation3], 1

</llo_original>
